<compile_context>
chip_gen: v5e
topology: v5e:2x2
jax: 0.10.0
libtpu: 0.0.40
codegen_flags: <defaults>
</compile_context>

<pallas_src>
import jax
import jax.numpy as jnp
from jax.experimental import pallas as pl
from jax.experimental.pallas import tpu as pltpu


def _round_up(x, m):
    return (x + m - 1) // m * m


def _conv_fold_kernel(p_ref, w_ref, b_ref, o_ref):
    # p_ref: (1, tile_m, K)       bf16 im2col patch tile, K = 9*Cin
    # w_ref: (K, tile_n)          bf16 folded conv weights
    # b_ref: (1, tile_n)          f32 bias tile
    # o_ref: (1, tile_m, tile_n)  f32 output tile
    acc = jnp.dot(p_ref[0], w_ref[...], preferred_element_type=jnp.float32)
    o_ref[0] = (acc + b_ref[...]).astype(o_ref.dtype)


def downsample_pallas_nhwc(x_nhwc, weight, bias, *, compute_dtype=jnp.bfloat16):
    """Conv2d(dim, dim, 3, stride=2, padding=1) forward, NHWC in / NHWC out.

    x_nhwc: (N, H, W, Cin) float32
    weight: (Cout, Cin, 3, 3) float32 (PyTorch layout)
    bias:   (Cout,) float32
    returns (N, Ho, Wo, Cout) float32 with Ho = ceil(H/2), Wo = ceil(W/2)
    """
    n, h, w, cin = x_nhwc.shape
    cout = weight.shape[0]
    ho = (h + 2 - 3) // 2 + 1
    wo = (w + 2 - 3) // 2 + 1
    howo = ho * wo
    k_dim = 9 * cin

    # --- glue: pad + build the folded im2col (N, Ho*Wo, 9*Cin) in bf16 ---
    xc = x_nhwc.astype(compute_dtype)
    xp = jnp.pad(xc, ((0, 0), (1, 1), (1, 1), (0, 0)))
    taps = [
        xp[:, kh:kh + 2 * ho:2, kw:kw + 2 * wo:2, :].reshape(n, howo, cin)
        for kh in range(3) for kw in range(3)
    ]
    patches = jnp.concatenate(taps, axis=-1)                      # (N, Ho*Wo, 9*Cin)

    # weight (Cout, Cin, 3, 3) -> (9*Cin, Cout), same (kh, kw, cin) ordering as taps
    w_mat = jnp.transpose(weight, (2, 3, 1, 0)).reshape(k_dim, cout).astype(compute_dtype)

    # --- tiling: sublane-friendly Ho*Wo tiles, lane-dense Cout tiles (pad to 128) ---
    tile_m = min(256, _round_up(howo, 16))
    m_pad = _round_up(howo, tile_m)
    cout_p = _round_up(cout, 128)
    tile_n = min(256, cout_p)

    if m_pad != howo:
        patches = jnp.pad(patches, ((0, 0), (0, m_pad - howo), (0, 0)))
    if cout_p != cout:
        w_mat = jnp.pad(w_mat, ((0, 0), (0, cout_p - cout)))
    b2d = jnp.pad(bias.astype(jnp.float32).reshape(1, cout),
                  ((0, 0), (0, cout_p - cout)))

    grid = (n, m_pad // tile_m, cout_p // tile_n)

    # explicit VMEM budget: double-buffered blocks x4 headroom, clamped per-chip-safe
    blk_bytes = 2 * (tile_m * k_dim * patches.dtype.itemsize
                     + k_dim * tile_n * w_mat.dtype.itemsize
                     + tile_n * 4
                     + tile_m * tile_n * 4)
    vmem_limit = int(min(max(4 * blk_bytes, 16 << 20), 48 << 20))

    out = pl.pallas_call(
        _conv_fold_kernel,
        out_shape=jax.ShapeDtypeStruct((n, m_pad, cout_p), jnp.float32),
        grid_spec=pltpu.PrefetchScalarGridSpec(
            num_scalar_prefetch=0,
            grid=grid,
            in_specs=[
                pl.BlockSpec((1, tile_m, k_dim), lambda b, i, j: (b, i, 0)),
                pl.BlockSpec((k_dim, tile_n), lambda b, i, j: (0, j)),
                pl.BlockSpec((1, tile_n), lambda b, i, j: (0, j)),
            ],
            out_specs=pl.BlockSpec((1, tile_m, tile_n), lambda b, i, j: (b, i, j)),
        ),
        compiler_params=pltpu.CompilerParams(
            dimension_semantics=("parallel", "parallel", "parallel"),
            vmem_limit_bytes=vmem_limit,
        ),
    )(patches, w_mat, b2d)

    out = out[:, :howo, :cout].reshape(n, ho, wo, cout)
    return out.astype(x_nhwc.dtype)


def downsample_pallas(x_nchw, weight, bias, *, compute_dtype=jnp.bfloat16):
    """PyTorch-parity wrapper: NCHW in / NCHW out.

    Prefer downsample_pallas_nhwc when the surrounding UNet is kept in NHWC,
    so these transposes are not re-executed around every Downsample call.
    """
    x_nhwc = jnp.transpose(x_nchw, (0, 2, 3, 1))
    out = downsample_pallas_nhwc(x_nhwc, weight, bias, compute_dtype=compute_dtype)
    return jnp.transpose(out, (0, 3, 1, 2))


if __name__ == "__main__":
    key = jax.random.PRNGKey(0)
    k_x, k_w, k_b = jax.random.split(key, 3)

    N, C, H, W = 2, 4, 16, 16  # Downsample(dim=4) toy config
    x = jax.random.normal(k_x, (N, C, H, W), dtype=jnp.float32)
    # deterministic synthetic parameters (Conv2d(dim, dim, 3, 2, 1) shapes)
    weight = jax.random.normal(k_w, (C, C, 3, 3), dtype=jnp.float32) * 0.1
    bias = jax.random.normal(k_b, (C,), dtype=jnp.float32) * 0.1

    y = downsample_pallas(x, weight, bias)
    y = jax.block_until_ready(y)

    # reference: XLA conv in full f32 (NCHW, stride 2, pad 1)
    y_ref = jax.lax.conv_general_dilated(
        x, weight, window_strides=(2, 2), padding=((1, 1), (1, 1)),
        dimension_numbers=("NCHW", "OIHW", "NCHW"),
    ) + bias.reshape(1, C, 1, 1)

    assert y.shape == (N, C, 8, 8), y.shape
    # bf16 MXU operands with f32 accumulation -> loose tolerance vs pure-f32 reference
    max_err = float(jnp.max(jnp.abs(y - y_ref)))
    assert max_err < 5e-2, max_err

    print("KERNEL_OK")
</pallas_src>

<mosaic_0001>
module attributes {stable_mosaic.version = 11 : i64} {
  func.func @_conv_fold_kernel(%arg0: i32, %arg1: i32, %arg2: i32, %arg3: memref<1x64x36xbf16, #tpu.memory_space<vmem>>, %arg4: memref<36x128xbf16, #tpu.memory_space<vmem>>, %arg5: memref<1x128xf32, #tpu.memory_space<vmem>>, %arg6: memref<1x64x128xf32, #tpu.memory_space<vmem>>) attributes {dimension_semantics = [#tpu.dimension_semantics<parallel>, #tpu.dimension_semantics<parallel>, #tpu.dimension_semantics<parallel>], iteration_bounds = array<i64: 2, 1, 1>, scalar_prefetch = 0 : i64, scratch_operands = 0 : i64, tpu.core_type = #tpu.core_type<tc>, window_params = [{transform_indices = @transform_0, window_bounds = array<i64: 1, 64, 36>}, {transform_indices = @transform_1, window_bounds = array<i64: 36, 128>}, {transform_indices = @transform_2, window_bounds = array<i64: 1, 128>}, {transform_indices = @transform_3, window_bounds = array<i64: 1, 64, 128>}]} {
    %c0 = arith.constant 0 : index
    %c0_0 = arith.constant 0 : index
    %c0_1 = arith.constant 0 : index
    %0 = vector.load %arg3[%c0, %c0_0, %c0_1] : memref<1x64x36xbf16, #tpu.memory_space<vmem>>, vector<1x64x36xbf16>
    %1 = vector.shape_cast %0 : vector<1x64x36xbf16> to vector<64x36xbf16>
    %c0_2 = arith.constant 0 : index
    %c0_3 = arith.constant 0 : index
    %2 = vector.load %arg4[%c0_2, %c0_3] : memref<36x128xbf16, #tpu.memory_space<vmem>>, vector<36x128xbf16>
    %cst = arith.constant dense<0.000000e+00> : vector<64x128xf32>
    %3 = tpu.matmul %1, %2, %cst {dimension_numbers = #tpu.dot_dimension_numbers<[1], [0], [0], [1], [0, 0, 1, 1], [], []>} : vector<64x36xbf16>, vector<36x128xbf16>, vector<64x128xf32> -> vector<64x128xf32>
    %c0_4 = arith.constant 0 : index
    %c0_5 = arith.constant 0 : index
    %4 = vector.load %arg5[%c0_4, %c0_5] : memref<1x128xf32, #tpu.memory_space<vmem>>, vector<1x128xf32>
    %5 = vector.broadcast %4 : vector<1x128xf32> to vector<64x128xf32>
    %6 = arith.addf %3, %5 : vector<64x128xf32>
    %c0_6 = arith.constant 0 : index
    %c0_7 = arith.constant 0 : index
    %c0_8 = arith.constant 0 : index
    %7 = vector.load %arg6[%c0_6, %c0_7, %c0_8] : memref<1x64x128xf32, #tpu.memory_space<vmem>>, vector<1x64x128xf32>
    %8 = vector.shape_cast %7 : vector<1x64x128xf32> to vector<64x128xf32>
    %9 = vector.shape_cast %6 : vector<64x128xf32> to vector<1x64x128xf32>
    tpu.vector_store %arg6[%c0_6, %c0_7, %c0_8], %9 {strides = array<i32>} : memref<1x64x128xf32, #tpu.memory_space<vmem>>, vector<1x64x128xf32>,
    return
  }
  func.func @transform_0(%arg0: i32, %arg1: i32, %arg2: i32) -> (i32, i32, i32) {
    %c0_i32 = arith.constant 0 : i32
    %c0_i32_0 = arith.constant 0 : i32
    return %arg0, %arg1, %c0_i32 : i32, i32, i32
  }
  func.func @transform_1(%arg0: i32, %arg1: i32, %arg2: i32) -> (i32, i32) {
    %c0_i32 = arith.constant 0 : i32
    %c0_i32_0 = arith.constant 0 : i32
    return %c0_i32, %arg2 : i32, i32
  }
  func.func @transform_2(%arg0: i32, %arg1: i32, %arg2: i32) -> (i32, i32) {
    %c0_i32 = arith.constant 0 : i32
    %c0_i32_0 = arith.constant 0 : i32
    return %c0_i32, %arg2 : i32, i32
  }
  func.func @transform_3(%arg0: i32, %arg1: i32, %arg2: i32) -> (i32, i32, i32) {
    %c0_i32 = arith.constant 0 : i32
    return %arg0, %arg1, %arg2 : i32, i32, i32
  }
}

</mosaic_0001>

<llo_original>
// kernel: tpu_custom_call.1
$region0: #{tpu_custom_call.1}
  #allocation0 [shape = 'u32[]', space=smem, size = 0x4, offset = 0x4, fixed_abs, tag = 'smem constant byte address 0x4 - core index']
  #allocation1 [shape = 'u32[72,128]{1,0:T(1,128)}', space=vmem, size = 0x9000, scoped, tag = 'internal scratch']
  %s0 = inlined_call_operand.vmem [shape: bf16[2,64,36], index: 0, kind: input, shape index: {}]
  %s1 = inlined_call_operand.vmem [shape: bf16[36,128], index: 1, kind: input, shape index: {}]
  %s2 = inlined_call_operand.vmem [shape: f32[1,128], index: 2, kind: input, shape index: {}]
  %s3 = inlined_call_operand.hbm [shape: f32[2,64,128], index: 3, kind: output, shape index: {}]
  %s4 = sld [smem:[#allocation0]]
  $region45: #{tpu_custom_call.1} parent=0
    _
  %s6 = ssub.s32 1, %s4
  %s7 = scalar_select 0, %s6, %s4
  $region1: #{tpu_custom_call.1} parent=0
    #allocation2 [shape = 'u8[65536]{0}', space=vmem, size = 0x10000, scoped, tag = 'output window, operand 0']
    #allocation3 [shape = 's32[2]{0}', space=sflag, size = 0x8, scoped, tag = 'scoped memory for tpu_custom_call.1']
    %8 = vsyncpa [#allocation3], 0
    %s9 = scalar_lea.sflag [#allocation3], 1
    %10 = vsyncpa %s9, 0
    loop: start=0, step=1, limit=4
    $region2: #{tpu_custom_call.1} parent=1 // loop_pre_header
      _
    $region3: #{tpu_custom_call.1} parent=1 // loop_header
      %s12 = sphi 0, %s16
      %p13 = scmp.ge.s32.totalorder %s12, 4
      %s19 = sphi 0, %s38
      %s20 = sphi 0, %s34
      %s21 = sphi 0, %s30
      %s22 = sphi 0, %s19
      %s23 = sphi 0, %s20
      %s24 = sphi 0, %s21
      %s25 = sphi 0, %s22
      %s26 = sphi 0, %s23
      %s27 = sphi 0, %s24
      %s43 = sphi 0, %s45
      %s46 = sphi 0, %s43
      %s47 = sphi 0, %s46
      %s63 = sphi 0, %s47
      %s69 = sphi 0, %s71
      %s72 = sphi 0, %s69
      %s73 = sphi 0, %s72
      %s89 = sphi 0, %s73
      %s95 = sphi 0, %s97
      %s98 = sphi 0, %s95
      %s99 = sphi 0, %s98
      %s115 = sphi 0, %s99
      %s125 = sphi 0, %s127
      %s128 = sphi 0, %s125
      %s129 = sphi 0, %s128
      %s145 = sphi 0, %s129
    $region4: #{tpu_custom_call.1} parent=1 // loop_header_branch
      %15 = sbr.rel (%p13) target = $region8
    $region5: #{tpu_custom_call.1} parent=1 // loop_body
      %s17 = ssub.s32 %s12, 1
      %s18 = ssub.s32 %s12, 2
      %s28 = sadd.s32 1, %s21
      %p29 = scmp.ge.s32.totalorder %s28, 1
      %s30 = scalar_select %p29, 0, %s28
      %s31 = sadd.s32 1, %s20
      %s32 = scalar_select %p29, %s31, %s20
      %p33 = scmp.ge.s32.totalorder %s32, 1
      %s34 = scalar_select %p33, 0, %s32
      %s35 = sadd.s32 1, %s19
      %s36 = scalar_select %p33, %s35, %s19
      %p37 = scmp.ge.s32.totalorder %s36, 2
      %s38 = scalar_select %p37, 0, %s36
      %s39 = ssub.s32 %s19, %s38
      %s40 = ssub.s32 %s20, %s34
      %s41 = sor.u32 %s39, %s40
      %p42 = scmp.eq.s32.totalorder %s41, 0
      %s44 = sadd.s32 %s43, 1
      %s45 = scalar_select %p42, %s43, %s44
      %p48 = pneg %p42
      %p49 = scmp.eq.s32.totalorder %s12, 1
      %p50 = por %p48, %p49
      %p51 = scmp.ne.s32.totalorder %s43, %s46
      %p52 = scmp.eq.s32.totalorder %s12, 0
      %p53 = por %p51, %p52
      %p54 = scmp.ne.s32.totalorder %s43, %s46
      %p55 = scmp.eq.s32.totalorder %s17, 1
      %p56 = por %p54, %p55
      %p57 = scmp.ne.s32.totalorder %s46, %s47
      %p58 = scmp.eq.s32.totalorder %s17, 0
      %p59 = por %p57, %p58
      %p60 = scmp.ne.s32.totalorder %s46, %s47
      %p61 = scmp.eq.s32.totalorder %s18, 1
      %p62 = por %p60, %p61
      %p64 = scmp.ne.s32.totalorder %s47, %s63
      %p65 = scmp.eq.s32.totalorder %s18, 0
      %p66 = por %p64, %p65
      %s67 = ssub.s32 %s21, %s30
      %p68 = scmp.eq.s32.totalorder %s67, 0
      %s70 = sadd.s32 %s69, 1
      %s71 = scalar_select %p68, %s69, %s70
      %p74 = pneg %p68
      %p75 = scmp.eq.s32.totalorder %s12, 1
      %p76 = por %p74, %p75
      %p77 = scmp.ne.s32.totalorder %s69, %s72
      %p78 = scmp.eq.s32.totalorder %s12, 0
      %p79 = por %p77, %p78
      %p80 = scmp.ne.s32.totalorder %s69, %s72
      %p81 = scmp.eq.s32.totalorder %s17, 1
      %p82 = por %p80, %p81
      %p83 = scmp.ne.s32.totalorder %s72, %s73
      %p84 = scmp.eq.s32.totalorder %s17, 0
      %p85 = por %p83, %p84
      %p86 = scmp.ne.s32.totalorder %s72, %s73
      %p87 = scmp.eq.s32.totalorder %s18, 1
      %p88 = por %p86, %p87
      %p90 = scmp.ne.s32.totalorder %s73, %s89
      %p91 = scmp.eq.s32.totalorder %s18, 0
      %p92 = por %p90, %p91
      %s93 = ssub.s32 %s21, %s30
      %p94 = scmp.eq.s32.totalorder %s93, 0
      %s96 = sadd.s32 %s95, 1
      %s97 = scalar_select %p94, %s95, %s96
      %p100 = pneg %p94
      %p101 = scmp.eq.s32.totalorder %s12, 1
      %p102 = por %p100, %p101
      %p103 = scmp.ne.s32.totalorder %s95, %s98
      %p104 = scmp.eq.s32.totalorder %s12, 0
      %p105 = por %p103, %p104
      %p106 = scmp.ne.s32.totalorder %s95, %s98
      %p107 = scmp.eq.s32.totalorder %s17, 1
      %p108 = por %p106, %p107
      %p109 = scmp.ne.s32.totalorder %s98, %s99
      %p110 = scmp.eq.s32.totalorder %s17, 0
      %p111 = por %p109, %p110
      %p112 = scmp.ne.s32.totalorder %s98, %s99
      %p113 = scmp.eq.s32.totalorder %s18, 1
      %p114 = por %p112, %p113
      %p116 = scmp.ne.s32.totalorder %s99, %s115
      %p117 = scmp.eq.s32.totalorder %s18, 0
      %p118 = por %p116, %p117
      %s119 = ssub.s32 %s19, %s38
      %s120 = ssub.s32 %s20, %s34
      %s121 = sor.u32 %s119, %s120
      %s122 = ssub.s32 %s21, %s30
      %s123 = sor.u32 %s121, %s122
      %p124 = scmp.eq.s32.totalorder %s123, 0
      %s126 = sadd.s32 %s125, 1
      %s127 = scalar_select %p124, %s125, %s126
      %p130 = pneg %p124
      %p131 = scmp.eq.s32.totalorder %s12, 1
      %p132 = por %p130, %p131
      %p133 = scmp.ne.s32.totalorder %s125, %s128
      %p134 = scmp.eq.s32.totalorder %s12, 0
      %p135 = por %p133, %p134
      %p136 = scmp.ne.s32.totalorder %s125, %s128
      %p137 = scmp.eq.s32.totalorder %s17, 1
      %p138 = por %p136, %p137
      %p139 = scmp.ne.s32.totalorder %s128, %s129
      %p140 = scmp.eq.s32.totalorder %s17, 0
      %p141 = por %p139, %p140
      %p142 = scmp.ne.s32.totalorder %s128, %s129
      %p143 = scmp.eq.s32.totalorder %s18, 1
      %p144 = por %p142, %p143
      %p146 = scmp.ne.s32.totalorder %s129, %s145
      %p147 = scmp.eq.s32.totalorder %s18, 0
      %p148 = por %p146, %p147
      %p149 = scmp.le.s32.totalorder 1, %s12
      %p150 = scmp.lt.s32.totalorder %s12, 3
      %p151 = pnand %p149, %p150
      %p152 = pneg %p151
      // Predicated region
      $region9: #{tpu_custom_call.1} parent=5 // pred_check
        _
      $region10: #{tpu_custom_call.1} parent=5 // pred_check_branch
        %154 = sbr.rel (%p151) target = $region12
      $region11: #{tpu_custom_call.1} parent=5 // pred_region
        %s155 = ssub.s32 %s12, 1
        // Predicated region
        $region13: #{tpu_custom_call.1} parent=11 // pred_check
          %p156 = pneg %p85
        $region14: #{tpu_custom_call.1} parent=11 // pred_check_branch
          %158 = sbr.rel (%p156) target = $region16
        $region15: #{tpu_custom_call.1} parent=11 // pred_region
          %p159 = scmp.lt.s32.totalorder %s24, 0
          %s160 = scalar_select %p159, %s24, 0
          %s161 = smul.addr %s160, 4
          %s162 = scalar_lea.vmem %s1, %s161
        $region16: #{tpu_custom_call.1} parent=11 // pred_fallthru
          _
        // Predicated region
        $region17: #{tpu_custom_call.1} parent=11 // pred_check
          %p163 = pneg %p111
        $region18: #{tpu_custom_call.1} parent=11 // pred_check_branch
          %165 = sbr.rel (%p163) target = $region20
        $region19: #{tpu_custom_call.1} parent=11 // pred_region
          %p166 = scmp.lt.s32.totalorder %s24, 0
          %s167 = scalar_select %p166, %s24, 0
          %s168 = scalar_lea.vmem %s2, %s167
        $region20: #{tpu_custom_call.1} parent=11 // pred_fallthru
          _
      $region12: #{tpu_custom_call.1} parent=5 // pred_fallthru
        _
      %p169 = scmp.lt.s32.totalorder %s12, 2
      // Predicated region
      $region21: #{tpu_custom_call.1} parent=5 // pred_check
        %p170 = pneg %p169
      $region22: #{tpu_custom_call.1} parent=5 // pred_check_branch
        %172 = sbr.rel (%p170) target = $region24
      $region23: #{tpu_custom_call.1} parent=5 // pred_region
        // Predicated region
        $region25: #{tpu_custom_call.1} parent=23 // pred_check
          %p173 = pneg %p53
        $region26: #{tpu_custom_call.1} parent=23 // pred_check_branch
          %175 = sbr.rel (%p173) target = $region28
        $region27: #{tpu_custom_call.1} parent=23 // pred_region
          %s176 = smul.u32 8, %s20
          %p177 = scmp.lt.s32.totalorder %s19, 1
          %s178 = scalar_select %p177, %s19, 1
          %p179 = scmp.lt.s32.totalorder %s176, 7
          %s180 = scalar_select %p179, %s176, 7
          %s181 = smul.addr %s178, 8
          %s182 = sadd.s32 %s180, %s181
          %s183 = smul.addr %s182, 4
          %s184 = scalar_lea.vmem %s0, %s183
          %s185 = smul.u32 8, %s20
        $region28: #{tpu_custom_call.1} parent=23 // pred_fallthru
          _
      $region24: #{tpu_custom_call.1} parent=5 // pred_fallthru
        _
      %p186 = scmp.le.s32.totalorder 1, %s12
      %p187 = scmp.lt.s32.totalorder %s12, 3
      %p188 = pnand %p186, %p187
      %p189 = pneg %p188
      // Predicated region
      $region29: #{tpu_custom_call.1} parent=5 // pred_check
        _
      $region30: #{tpu_custom_call.1} parent=5 // pred_check_branch
        %191 = sbr.rel (%p188) target = $region32
      $region31: #{tpu_custom_call.1} parent=5 // pred_region
        %s192 = ssub.s32 %s12, 1
        %s193 = smul.u32 8, %s23
        %p194 = scmp.lt.s32.totalorder %s22, 1
        %s195 = scalar_select %p194, %s22, 1
        %p196 = scmp.lt.s32.totalorder %s193, 7
        %s197 = scalar_select %p196, %s193, 7
        %s198 = smul.addr %s195, 8
        %s199 = sadd.s32 %s197, %s198
        %s200 = smul.addr %s199, 4
        %s201 = scalar_lea.vmem %s0, %s200
        %p202 = pneg %p59
        %p203 = pneg %p56
        %p204 = scmp.lt.s32.totalorder %s24, 0
        %s205 = scalar_select %p204, %s24, 0
        %s206 = smul.addr %s205, 4
        %s207 = scalar_lea.vmem %s1, %s206
        %p208 = pneg %p85
        %p209 = pneg %p82
        %p210 = scmp.lt.s32.totalorder %s24, 0
        %s211 = scalar_select %p210, %s24, 0
        %s212 = scalar_lea.vmem %s2, %s211
        %p213 = pneg %p111
        %p214 = pneg %p108
        %p215 = pneg %p141
        %p216 = pneg %p138
        %s217 = sand.u32 %s128, 1
        %s218 = scalar_lea.sflag [#allocation3], %s217
        %s219 = sand.u32 %s128, 1
        %s220 = smul.addr %s219, 64
        %s221 = scalar_lea.vmem [#allocation2], %s220
        %s222 = smul.u32 8, %s23
        %p223 = scmp.lt.s32.totalorder %s22, 1
        %s224 = scalar_select %p223, %s22, 1
        %p225 = scmp.lt.s32.totalorder %s222, 7
        %s226 = scalar_select %p225, %s222, 7
        %s227 = smul.addr %s224, 8
        %s228 = sadd.s32 %s226, %s227
        %s229 = smul.addr %s228, 4
        %s230 = scalar_lea.vmem %s0, %s229
        %s231 = smul.u32 8, %s23
        %p232 = scmp.lt.s32.totalorder %s24, 0
        %s233 = scalar_select %p232, %s24, 0
        %s234 = smul.addr %s233, 4
        %s235 = scalar_lea.vmem %s1, %s234
        %p236 = scmp.lt.s32.totalorder %s24, 0
        %s237 = scalar_select %p236, %s24, 0
        %s238 = scalar_lea.vmem %s2, %s237
        %s239 = smul.u32 8, %s23
        %v241 = vld [vmem:[%s230] sm:$0xf]
        %v242 = vld [vmem:[%s230 + $0x4] sm:$0xf]
        %v243 = vld [vmem:[%s230 + $0x8] sm:$0xf]
        %v244 = vld [vmem:[%s230 + $0xc] sm:$0xf]
        %v245 = vld [vmem:[%s230 + $0x10] sm:$0xf]
        %v246 = vld [vmem:[%s230 + $0x14] sm:$0xf]
        %v247 = vld [vmem:[%s230 + $0x18] sm:$0xf]
        %v248 = vld [vmem:[%s230 + $0x1c] sm:$0xf]
        %v249 = vld [vmem:[%s235] sm:$0xf]
        %v250 = vld [vmem:[%s235 + $0x4] sm:$0xf]
        %v251 = vld [vmem:[%s235 + $0x8] sm:$0xf]
        %v252 = vld [vmem:[%s235 + $0xc] sm:$0xf]
        %v253 = vld [vmem:[%s235 + $0x10] sm:$0x3]
        %v254 = vld [vmem:[%s238] sm:$0x1]
        %v256 = vperm.slane %v254, 0
        %v266 = vunpack.c.l.b16 %v241
        %v267 = vunpack.c.l.b16 %v242
        %v268 = vunpack.c.l.b16 %v243
        %v269 = vunpack.c.l.b16 %v244
        %v270 = vunpack.c.l.b16 %v245
        %v271 = vunpack.c.l.b16 %v246
        %v272 = vunpack.c.l.b16 %v247
        %v273 = vunpack.c.l.b16 %v248
        %v274 = vpack.c.b16 %v267, %v266
        %v275 = vpack.c.b16 %v269, %v268
        %v276 = vpack.c.b16 %v271, %v270
        %v277 = vpack.c.b16 %v273, %v272
        %v283 = vunpack.c.l.b16 %v249
        %v284 = vunpack.c.l.b16 %v250
        %v285 = vunpack.c.l.b16 %v251
        %v286 = vunpack.c.l.b16 %v252
        %v287 = vunpack.c.l.b16 %v253
        %v288 = vpack.c.b16 %v284, %v283
        %v289 = vpack.c.b16 %v286, %v285
        %v290 = vpack.c.b16 %v287, %v287
        %vm293 = vcmask 293888
        %v295 = vsel %vm293, %v274, 0
        %v298 = vsel %vm293, %v275, 0
        %v301 = vsel %vm293, %v276, 0
        %v304 = vsel %vm293, %v277, 0
        %vm306 = vcmask 1041408
        %v308 = vsel %vm306, %v290, 0
        %310 = vmatpush.bf16.msra.mxu0 0
        %311 = vmatpush.bf16.msra.mxu0 0
        %312 = vmatpush.bf16.msra.mxu0 0
        %313 = vmatpush.bf16.msra.mxu0 0
        %314 = vmatpush.bf16.msra.mxu0 0
        %315 = vmatpush.bf16.msra.mxu0 %v308
        %316 = vmatpush.bf16.msra.mxu0 %v289
        %317 = vmatpush.bf16.msra.mxu0 %v288
        %318 = vmatmul.bf16.gmra.mxu0 %v295
        %v319 = vpop.f32.mrf.mxu0
        %v320 = vadd.f32 %v256, %v319
        %v321 = vpop.f32.mrf.mxu0
        %v322 = vadd.f32 %v256, %v321
        %323 = vmatmul.bf16.gmra.mxu0 %v298
        %v324 = vpop.f32.mrf.mxu0
        %v325 = vadd.f32 %v256, %v324
        %v326 = vpop.f32.mrf.mxu0
        %v327 = vadd.f32 %v256, %v326
        %328 = vmatmul.bf16.gmra.mxu0 %v301
        %v329 = vpop.f32.mrf.mxu0
        %v330 = vadd.f32 %v256, %v329
        %v331 = vpop.f32.mrf.mxu0
        %v332 = vadd.f32 %v256, %v331
        %333 = vmatmul.bf16.gmra.mxu0 %v304
        %v334 = vpop.f32.mrf.mxu0
        %v335 = vadd.f32 %v256, %v334
        %v336 = vpop.f32.mrf.mxu0
        %v337 = vadd.f32 %v256, %v336
        %338 = vdwg.mxu0
        %339 = vst [vmem:[%s221] sm:$0xff] %v320
        %340 = vst [vmem:[%s221 + $0x8] sm:$0xff] %v322
        %341 = vst [vmem:[%s221 + $0x10] sm:$0xff] %v325
        %342 = vst [vmem:[%s221 + $0x18] sm:$0xff] %v327
        %343 = vst [vmem:[%s221 + $0x20] sm:$0xff] %v330
        %344 = vst [vmem:[%s221 + $0x28] sm:$0xff] %v332
        %345 = vst [vmem:[%s221 + $0x30] sm:$0xff] %v335
        %346 = vst [vmem:[%s221 + $0x38] sm:$0xff] %v337
        %s347 = sand.u32 %s128, 1
        %s348 = scalar_lea.sflag [#allocation3], %s347
        %s349 = sand.u32 %s128, 1
        %s350 = smul.addr %s349, 64
        %s351 = scalar_lea.vmem [#allocation2], %s350
        // Predicated region
        $region33: #{tpu_custom_call.1} parent=31 // pred_check
          %p352 = pneg %p138
        $region34: #{tpu_custom_call.1} parent=31 // pred_check_branch
          %354 = sbr.rel (%p352) target = $region36
        $region35: #{tpu_custom_call.1} parent=31 // pred_region
          %s355 = smul.u32 8, %s23
          %357 = vsyncadd %s348, 0
          %s358 = sadd.s32 %s24, %s355
          %s359 = smul.addr %s22, 8
          %s360 = sadd.s32 %s358, %s359
          %s361 = smul.addr %s360, 8
          %s362 = scalar_lea.hbm %s3, %s361
          %s363 = sshll.u32 %s351, 4
          %s364 = int_to_ptr.vmem [resolvable:$true] %s363
          %s365 = sshll.u32 %s362, 4
          %s366 = int_to_ptr.hbm [resolvable:$true] %s365
          %371 = dma.vmem_to_hbm [thread:$0]  %s364, 1024, %s366, %s348, 128, 128, 8
        $region36: #{tpu_custom_call.1} parent=31 // pred_fallthru
          _
      $region32: #{tpu_custom_call.1} parent=5 // pred_fallthru
        _
      %p372 = scmp.le.s32.totalorder 2, %s12
      // Predicated region
      $region37: #{tpu_custom_call.1} parent=5 // pred_check
        %p373 = pneg %p372
      $region38: #{tpu_custom_call.1} parent=5 // pred_check_branch
        %375 = sbr.rel (%p373) target = $region40
      $region39: #{tpu_custom_call.1} parent=5 // pred_region
        %s376 = ssub.s32 %s12, 2
        // Predicated region
        $region41: #{tpu_custom_call.1} parent=39 // pred_check
          %p377 = pneg %p144
        $region42: #{tpu_custom_call.1} parent=39 // pred_check_branch
          %379 = sbr.rel (%p377) target = $region44
        $region43: #{tpu_custom_call.1} parent=39 // pred_region
          %s380 = sand.u32 %s129, 1
          %s381 = scalar_lea.sflag [#allocation3], %s380
          %s382 = sand.u32 %s129, 1
          %s383 = smul.addr %s382, 64
          %s384 = scalar_lea.vmem [#allocation2], %s383
          %386 = dma.done %s381, 1024
        $region44: #{tpu_custom_call.1} parent=39 // pred_fallthru
          _
      $region40: #{tpu_custom_call.1} parent=5 // pred_fallthru
        _
    $region6: #{tpu_custom_call.1} parent=1 // loop_footer
      %s16 = sadd.s32 1, %s12
    $region7: #{tpu_custom_call.1} parent=1 // loop_footer_branch
      %11 = sbr.rel target = $region3
    $region8: #{tpu_custom_call.1} parent=1 // loop_exit
      _
    %387 = vsyncpa [#allocation3], 1
    %s388 = scalar_lea.sflag [#allocation3], 1
    %389 = vsyncpa %s388, 1

</llo_original>
